<compile_context>
chip_gen: v7x
topology: tpu7x:2x2x1
jax: 0.10.0
libtpu: 0.0.40
codegen_flags: <defaults>
</compile_context>

<pallas_src>
import functools

import jax
import jax.numpy as jnp
from jax.experimental import pallas as pl
from jax.experimental.pallas import tpu as pltpu

# ---- loss hyper-parameters (from mcif_loss_v1.__init__) ---------------------
SDF_LAMBDA = 1.0
DIST_LAMBDA = 1.0
LATENT_LAMBDA = 0.0
NORMAL_LAMBDA = 0.001
INVS_LAMBDA = 0.001
GRAD_LAMBDA = 0.0005
DIST_EPS = 1e-6          # forward() default arg
COS_EPS = 1e-8           # F.cosine_similarity default eps

_LANE = 128
_SUBLANE = 8
# 512 rows * 128 lanes = 64K points per slab block.  f32: mf block 1.75 MiB +
# nmf block 1.25 MiB, x2 double buffering = 6 MiB -> safe on v5e/v6e/v7x.
_MAX_ROWS_PER_TILE = 512
# Leading "parallel" grid axis: shards the reduction across both TensorCores
# on v7x; on single-TC chips it is just two cheap serial outer iterations.
_NUM_CORE_SPLIT = 2
# Neutral pad value for pred_nmf_sdf / nmf_dist: exactly representable (also
# in bf16), > DIST_EPS (invs term -> 0) and < 0.1 (clamp no-op, dist term 0).
_NEUTRAL_NMF = 0.0625


def _round_up(x, m):
    return ((x + m - 1) // m) * m


def _cdiv(a, b):
    return (a + b - 1) // b


# ------------------------------- kernel --------------------------------------
# Accumulated raw sums (term index in the output block):
#   0: sum |pred_mf_sdf|                 (sdf_term numerator)
#   1: sum ||mf_grad - mf_norm||_2       (normal_dist_term numerator)
#   2: sum (1 - cos(mf_grad, mf_norm))   (normal_term numerator)
#   3: sum | |pred_nmf_sdf| - clamp(dist, 0.1) |   (dist_term numerator)
#   4: sum where(|s|>eps, 0, exp(-100|s|))          (invs_term numerator)
#   5: sum (||nmf_grad|| - 1)^2                     (grad_term numerator)
def _mcif_loss_kernel(mf_ref, nmf_ref, out_ref, *,
                      tm, tn, tm_pc, tn_pc, rows_tile):
    c = pl.program_id(0)          # core-split index (parallel axis)
    i = pl.program_id(1)          # tile index within this core's range

    @pl.when(i == 0)
    def _init():
        out_ref[...] = jnp.zeros_like(out_ref)

    def rsum(x):                  # (rows_tile, 128) -> (8, 128) vreg partial
        return jnp.sum(x.reshape(rows_tile // _SUBLANE, _SUBLANE, _LANE), axis=0)

    # ---- manifold slab: planes [sdf, gx, gy, gz, nx, ny, nz] ----------------
    @pl.when(jnp.logical_and(i < tm_pc, c * tm_pc + i < tm))
    def _mf():
        sdf = mf_ref[0].astype(jnp.float32)
        gx = mf_ref[1].astype(jnp.float32)
        gy = mf_ref[2].astype(jnp.float32)
        gz = mf_ref[3].astype(jnp.float32)
        nx = mf_ref[4].astype(jnp.float32)
        ny = mf_ref[5].astype(jnp.float32)
        nz = mf_ref[6].astype(jnp.float32)

        t_sdf = jnp.abs(sdf)

        dx, dy, dz = gx - nx, gy - ny, gz - nz
        t_ndist = jnp.sqrt(dx * dx + dy * dy + dz * dz)

        dot = gx * nx + gy * ny + gz * nz
        g2 = gx * gx + gy * gy + gz * gz
        n2 = nx * nx + ny * ny + nz * nz
        eps2 = jnp.float32(COS_EPS * COS_EPS)
        # single fused rsqrt; identical to F.cosine_similarity per-norm clamp
        cos = dot * jax.lax.rsqrt(jnp.maximum(g2, eps2) * jnp.maximum(n2, eps2))
        t_cos = 1.0 - cos

        out_ref[0, 0] += rsum(t_sdf)
        out_ref[0, 1] += rsum(t_ndist)
        out_ref[0, 2] += rsum(t_cos)

    # ---- off-manifold slab: planes [sdf, dist, gx, gy, gz] ------------------
    @pl.when(jnp.logical_and(i < tn_pc, c * tn_pc + i < tn))
    def _nmf():
        pnmf = nmf_ref[0].astype(jnp.float32)
        ndist = nmf_ref[1].astype(jnp.float32)
        qx = nmf_ref[2].astype(jnp.float32)
        qy = nmf_ref[3].astype(jnp.float32)
        qz = nmf_ref[4].astype(jnp.float32)

        pa = jnp.abs(pnmf)
        t_dist = jnp.abs(pa - jnp.minimum(ndist, jnp.float32(0.1)))
        t_invs = jnp.where(pa > jnp.float32(DIST_EPS),
                           jnp.float32(0.0), jnp.exp(-100.0 * pa))
        qmag = jnp.sqrt(qx * qx + qy * qy + qz * qz)
        t_eik = (qmag - 1.0) ** 2

        out_ref[0, 3] += rsum(t_dist)
        out_ref[0, 4] += rsum(t_invs)
        out_ref[0, 5] += rsum(t_eik)


# ------------------------------- wrapper --------------------------------------
def _pack_planar(planes_and_pads, rows_pad):
    """Pack flat planes (with per-plane neutral pad values) into a lane-dense
    planar slab of shape (n_planes, rows_pad, 128)."""
    total = rows_pad * _LANE
    rows = []
    for plane, pad_val in planes_and_pads:
        flat = jnp.ravel(plane)
        rows.append(jnp.pad(flat, (0, total - flat.shape[0]),
                            constant_values=pad_val))
    dtype = jnp.result_type(*rows)
    packed = jnp.stack([r.astype(dtype) for r in rows], axis=0)
    return packed.reshape(len(rows), rows_pad, _LANE)


def mcif_loss_pallas(pred_mf_sdf, mf_grad, mf_norm,
                     pred_nmf_sdf, nmf_grad, nmf_dist, sdf_latent):
    """pred_mf_sdf (B,N), mf_grad/mf_norm (B,N,3), pred_nmf_sdf/nmf_dist (B,M),
    nmf_grad (B,M,3), sdf_latent (B,L).  Returns (loss_total, term_dict, raw8)."""
    # Neutral-padding validity (padding must contribute exactly zero).
    assert DIST_EPS < _NEUTRAL_NMF <= 0.1, "neutral nmf pad out of range"

    n_mf = int(pred_mf_sdf.size)      # B*N true count (compile-time)
    n_nmf = int(pred_nmf_sdf.size)    # B*M true count (compile-time)
    rows_mf = max(1, _cdiv(n_mf, _LANE))
    rows_nmf = max(1, _cdiv(n_nmf, _LANE))
    rows_tile = min(_MAX_ROWS_PER_TILE,
                    _round_up(max(rows_mf, rows_nmf), _SUBLANE))

    tm = _cdiv(rows_mf, rows_tile)          # manifold tiles
    tn = _cdiv(rows_nmf, rows_tile)         # off-manifold tiles
    tm_pc = _cdiv(tm, _NUM_CORE_SPLIT)      # tiles per core (manifold)
    tn_pc = _cdiv(tn, _NUM_CORE_SPLIT)      # tiles per core (off-manifold)
    inner = max(tm_pc, tn_pc)

    # Each slab padded only to its own tile count (no cross-padding to the
    # longer stream).  Pad values are value-neutral for every term.
    # TODO(synk): this planar repack is a separate XLA pass over the inputs;
    # producing planar (plane-major) layout upstream would remove it entirely.
    mf_pack = _pack_planar(
        [(pred_mf_sdf, 0.0),
         (mf_grad[..., 0], 1.0), (mf_grad[..., 1], 0.0), (mf_grad[..., 2], 0.0),
         (mf_norm[..., 0], 1.0), (mf_norm[..., 1], 0.0), (mf_norm[..., 2], 0.0)],
        tm * rows_tile)
    nmf_pack = _pack_planar(
        [(pred_nmf_sdf, _NEUTRAL_NMF), (nmf_dist, _NEUTRAL_NMF),
         (nmf_grad[..., 0], 1.0), (nmf_grad[..., 1], 0.0), (nmf_grad[..., 2], 0.0)],
        tn * rows_tile)

    kernel = functools.partial(_mcif_loss_kernel, tm=tm, tn=tn,
                               tm_pc=tm_pc, tn_pc=tn_pc, rows_tile=rows_tile)

    bytes_accessed = int(mf_pack.size * mf_pack.dtype.itemsize
                         + nmf_pack.size * nmf_pack.dtype.itemsize
                         + _NUM_CORE_SPLIT * 6 * _SUBLANE * _LANE * 4)
    cost = pl.CostEstimate(
        flops=int(25 * mf_pack.shape[1] * _LANE + 20 * nmf_pack.shape[1] * _LANE),
        transcendentals=int(3 * mf_pack.shape[1] * _LANE
                            + 2 * nmf_pack.shape[1] * _LANE),
        bytes_accessed=bytes_accessed)

    partials = pl.pallas_call(
        kernel,
        out_shape=jax.ShapeDtypeStruct(
            (_NUM_CORE_SPLIT, 6, _SUBLANE, _LANE), jnp.float32),
        grid_spec=pltpu.PrefetchScalarGridSpec(
            num_scalar_prefetch=0,
            grid=(_NUM_CORE_SPLIT, inner),
            in_specs=[
                # manifold slab: walk this core's row-block range, clamped to
                # the last valid block (revisited blocks are not re-DMA'd).
                pl.BlockSpec(
                    (7, rows_tile, _LANE),
                    lambda c, i: (0, jnp.minimum(c * tm_pc + i, tm - 1), 0)),
                # off-manifold slab
                pl.BlockSpec(
                    (5, rows_tile, _LANE),
                    lambda c, i: (0, jnp.minimum(c * tn_pc + i, tn - 1), 0)),
            ],
            # per-core accumulator block, resident across the inner axis
            out_specs=pl.BlockSpec((1, 6, _SUBLANE, _LANE),
                                   lambda c, i: (c, 0, 0, 0)),
        ),
        compiler_params=pltpu.CompilerParams(
            dimension_semantics=("parallel", "arbitrary")),
        cost_estimate=cost,
    )(mf_pack, nmf_pack)

    # Tiny cross-core / cross-lane reduce of the (2, 6, 8, 128) partials.
    sums = jnp.sum(partials, axis=(0, 2, 3))        # (6,) raw term sums

    inv_mf = jnp.float32(1.0 / n_mf)
    inv_nmf = jnp.float32(1.0 / n_nmf)
    mf_loss = sums[0] * inv_mf
    ndist_loss = sums[1] * inv_mf
    cos_loss = sums[2] * inv_mf
    dist_loss = sums[3] * inv_nmf
    invs_loss = sums[4] * inv_nmf
    eik_loss = sums[5] * inv_nmf

    # Latent regularizer: O(B*L) plain-JAX glue (keeps the (B,L) tensor out of
    # the streaming kernel's VMEM working set; LATENT_LAMBDA == 0 anyway).
    lat = sdf_latent.astype(jnp.float32)
    latent_loss = jnp.sum(jnp.sqrt(jnp.sum(lat * lat, axis=-1)))

    total = (mf_loss * SDF_LAMBDA + dist_loss * DIST_LAMBDA
             + cos_loss * NORMAL_LAMBDA + invs_loss * INVS_LAMBDA
             + eik_loss * GRAD_LAMBDA + latent_loss * LATENT_LAMBDA)

    terms = {
        "sdf_term": mf_loss,
        "dist_term": dist_loss,
        "latent_term": latent_loss,
        "normal_term": cos_loss,
        "normal_dist_term": ndist_loss,
        "invs_term": invs_loss,
        "grad_term": eik_loss,
    }
    raw8 = jnp.stack([total, mf_loss, dist_loss, latent_loss,
                      cos_loss, ndist_loss, invs_loss, eik_loss])
    return total, terms, raw8


# ------------------------- pure-JAX reference (for checking) -----------------
def _reference(pred_mf_sdf, mf_grad, mf_norm, pred_nmf_sdf, nmf_grad, nmf_dist,
               sdf_latent):
    mf_loss = jnp.mean(jnp.abs(pred_mf_sdf))
    normals_loss_dist = jnp.mean(jnp.linalg.norm(mf_grad - mf_norm, axis=-1))
    dot = jnp.sum(mf_grad * mf_norm, axis=-1)
    gmag = jnp.maximum(jnp.linalg.norm(mf_grad, axis=-1), COS_EPS)
    nmag = jnp.maximum(jnp.linalg.norm(mf_norm, axis=-1), COS_EPS)
    normals_loss = jnp.mean(1.0 - dot / (gmag * nmag))
    grad_loss = jnp.mean((jnp.linalg.norm(nmf_grad, axis=-1) - 1.0) ** 2)
    dist_loss = jnp.mean(jnp.abs(jnp.abs(pred_nmf_sdf) - jnp.minimum(nmf_dist, 0.1)))
    invs = jnp.where(jnp.abs(pred_nmf_sdf) > DIST_EPS,
                     jnp.zeros_like(pred_nmf_sdf),
                     jnp.exp(-100.0 * jnp.abs(pred_nmf_sdf)))
    invs_loss = jnp.mean(invs)
    latent_loss = jnp.sum(jnp.linalg.norm(sdf_latent, axis=-1))
    total = (mf_loss * SDF_LAMBDA + dist_loss * DIST_LAMBDA
             + normals_loss * NORMAL_LAMBDA + invs_loss * INVS_LAMBDA
             + grad_loss * GRAD_LAMBDA + latent_loss * LATENT_LAMBDA)
    return jnp.array([total, mf_loss, dist_loss, latent_loss,
                      normals_loss, normals_loss_dist, invs_loss, grad_loss],
                     dtype=jnp.float32)


# ---------------------------------- main --------------------------------------
if __name__ == "__main__":
    key = jax.random.PRNGKey(0)
    B, N, M, L, H = 2, 8, 8, 16, 32
    ks = jax.random.split(key, 8)

    mf_pnts = jax.random.normal(ks[0], (B, N, 3), jnp.float32)
    mf_norm = jax.random.normal(ks[1], (B, N, 3), jnp.float32)
    mf_norm = mf_norm / jnp.linalg.norm(mf_norm, axis=-1, keepdims=True)
    nmf_pnts = jax.random.normal(ks[2], (B, M, 3), jnp.float32)
    nmf_dist = jnp.abs(jax.random.normal(ks[3], (B, M), jnp.float32)) * 0.2
    sdf_latent = jax.random.normal(ks[4], (B, L), jnp.float32) * 0.1

    # Deterministic synthetic SDF "network" producing pred_*_sdf from points,
    # so that gradient(inputs=points, outputs=pred_sdf) is well defined.
    W1 = jax.random.normal(ks[5], (3, H), jnp.float32) * 0.5
    b1 = jnp.linspace(-0.1, 0.1, H, dtype=jnp.float32)
    w2 = jax.random.normal(ks[6], (H,), jnp.float32) * 0.5
    b2 = jnp.float32(0.05)

    def sdf_fn(pts):                      # (..., 3) -> (...)
        h = jnp.tanh(pts @ W1 + b1)
        return h @ w2 + b2

    # TODO(synk): torch.autograd.grad (gradient()) is autodiff, not a tensor
    # op; it has no Pallas equivalent, so it is computed with jax.grad (glue).
    def gradient(pts):
        return jax.grad(lambda p: jnp.sum(sdf_fn(p)))(pts)

    pred_mf_sdf = sdf_fn(mf_pnts)         # (B, N)
    pred_nmf_sdf = sdf_fn(nmf_pnts)       # (B, M)
    mf_grad = gradient(mf_pnts)           # (B, N, 3)
    nmf_grad = gradient(nmf_pnts)         # (B, M, 3)

    loss_total, terms, all_out = mcif_loss_pallas(
        pred_mf_sdf, mf_grad, mf_norm, pred_nmf_sdf, nmf_grad, nmf_dist,
        sdf_latent)
    all_out = jax.block_until_ready(all_out)

    ref = _reference(pred_mf_sdf, mf_grad, mf_norm,
                     pred_nmf_sdf, nmf_grad, nmf_dist, sdf_latent)

    if not jnp.allclose(all_out, ref, atol=1e-5, rtol=1e-4):
        raise AssertionError(f"Pallas kernel mismatch:\n{all_out}\nvs ref\n{ref}")

    print("KERNEL_OK")
</pallas_src>

<mosaic_0001>
module attributes {stable_mosaic.version = 11 : i64} {
  func.func @_mcif_loss_kernel(%arg0: i32, %arg1: i32, %arg2: memref<7x8x128xf32, #tpu.memory_space<vmem>>, %arg3: memref<5x8x128xf32, #tpu.memory_space<vmem>>, %arg4: memref<1x6x8x128xf32, #tpu.memory_space<vmem>>) attributes {dimension_semantics = [#tpu.dimension_semantics<parallel>, #tpu.dimension_semantics<arbitrary>], iteration_bounds = array<i64: 2, 1>, scalar_prefetch = 0 : i64, scratch_operands = 0 : i64, tpu.core_type = #tpu.core_type<tc>, window_params = [{transform_indices = @transform_0, window_bounds = array<i64: 7, 8, 128>}, {transform_indices = @transform_1, window_bounds = array<i64: 5, 8, 128>}, {transform_indices = @transform_2, window_bounds = array<i64: 1, 6, 8, 128>}]} {
    %c0_i32 = arith.constant 0 : i32
    %0 = arith.cmpi eq, %arg1, %c0_i32 : i32
    %1 = arith.extui %0 : i1 to i32
    %c0_i32_0 = arith.constant 0 : i32
    %2 = arith.cmpi ne, %1, %c0_i32_0 : i32
    scf.if %2 {
      %cst = arith.constant 0.000000e+00 : f32
      %17 = vector.broadcast %cst : f32 to vector<1x6x8x128xf32>
      %c0 = arith.constant 0 : index
      %c0_8 = arith.constant 0 : index
      %c0_9 = arith.constant 0 : index
      %c0_10 = arith.constant 0 : index
      %18 = vector.load %arg4[%c0, %c0_8, %c0_9, %c0_10] : memref<1x6x8x128xf32, #tpu.memory_space<vmem>>, vector<1x6x8x128xf32>
      tpu.vector_store %arg4[%c0, %c0_8, %c0_9, %c0_10], %17 {strides = array<i32>} : memref<1x6x8x128xf32, #tpu.memory_space<vmem>>, vector<1x6x8x128xf32>,
    } else {
    }
    %c1_i32 = arith.constant 1 : i32
    %3 = arith.cmpi slt, %arg1, %c1_i32 : i32
    %c1_i32_1 = arith.constant 1 : i32
    %4 = arith.muli %arg0, %c1_i32_1 : i32
    %5 = arith.addi %4, %arg1 : i32
    %c1_i32_2 = arith.constant 1 : i32
    %6 = arith.cmpi slt, %5, %c1_i32_2 : i32
    %7 = arith.andi %3, %6 : i1
    %8 = arith.extui %7 : i1 to i32
    %c0_i32_3 = arith.constant 0 : i32
    %9 = arith.cmpi ne, %8, %c0_i32_3 : i32
    scf.if %9 {
      %c0 = arith.constant 0 : index
      %c0_8 = arith.constant 0 : index
      %c0_9 = arith.constant 0 : index
      %17 = vector.load %arg2[%c0, %c0_8, %c0_9] : memref<7x8x128xf32, #tpu.memory_space<vmem>>, vector<1x8x128xf32>
      %18 = vector.shape_cast %17 : vector<1x8x128xf32> to vector<8x128xf32>
      %c1 = arith.constant 1 : index
      %c0_10 = arith.constant 0 : index
      %c0_11 = arith.constant 0 : index
      %19 = vector.load %arg2[%c1, %c0_10, %c0_11] : memref<7x8x128xf32, #tpu.memory_space<vmem>>, vector<1x8x128xf32>
      %20 = vector.shape_cast %19 : vector<1x8x128xf32> to vector<8x128xf32>
      %c2 = arith.constant 2 : index
      %c0_12 = arith.constant 0 : index
      %c0_13 = arith.constant 0 : index
      %21 = vector.load %arg2[%c2, %c0_12, %c0_13] : memref<7x8x128xf32, #tpu.memory_space<vmem>>, vector<1x8x128xf32>
      %22 = vector.shape_cast %21 : vector<1x8x128xf32> to vector<8x128xf32>
      %c3 = arith.constant 3 : index
      %c0_14 = arith.constant 0 : index
      %c0_15 = arith.constant 0 : index
      %23 = vector.load %arg2[%c3, %c0_14, %c0_15] : memref<7x8x128xf32, #tpu.memory_space<vmem>>, vector<1x8x128xf32>
      %24 = vector.shape_cast %23 : vector<1x8x128xf32> to vector<8x128xf32>
      %c4 = arith.constant 4 : index
      %c0_16 = arith.constant 0 : index
      %c0_17 = arith.constant 0 : index
      %25 = vector.load %arg2[%c4, %c0_16, %c0_17] : memref<7x8x128xf32, #tpu.memory_space<vmem>>, vector<1x8x128xf32>
      %26 = vector.shape_cast %25 : vector<1x8x128xf32> to vector<8x128xf32>
      %c5 = arith.constant 5 : index
      %c0_18 = arith.constant 0 : index
      %c0_19 = arith.constant 0 : index
      %27 = vector.load %arg2[%c5, %c0_18, %c0_19] : memref<7x8x128xf32, #tpu.memory_space<vmem>>, vector<1x8x128xf32>
      %28 = vector.shape_cast %27 : vector<1x8x128xf32> to vector<8x128xf32>
      %c6 = arith.constant 6 : index
      %c0_20 = arith.constant 0 : index
      %c0_21 = arith.constant 0 : index
      %29 = vector.load %arg2[%c6, %c0_20, %c0_21] : memref<7x8x128xf32, #tpu.memory_space<vmem>>, vector<1x8x128xf32>
      %30 = vector.shape_cast %29 : vector<1x8x128xf32> to vector<8x128xf32>
      %31 = math.absf %18 : vector<8x128xf32>
      %32 = arith.subf %20, %26 : vector<8x128xf32>
      %33 = arith.subf %22, %28 : vector<8x128xf32>
      %34 = arith.subf %24, %30 : vector<8x128xf32>
      %35 = arith.mulf %32, %32 : vector<8x128xf32>
      %36 = arith.mulf %33, %33 : vector<8x128xf32>
      %37 = arith.addf %35, %36 : vector<8x128xf32>
      %38 = arith.mulf %34, %34 : vector<8x128xf32>
      %39 = arith.addf %37, %38 : vector<8x128xf32>
      %40 = math.sqrt %39 : vector<8x128xf32>
      %41 = arith.mulf %20, %26 : vector<8x128xf32>
      %42 = arith.mulf %22, %28 : vector<8x128xf32>
      %43 = arith.addf %41, %42 : vector<8x128xf32>
      %44 = arith.mulf %24, %30 : vector<8x128xf32>
      %45 = arith.addf %43, %44 : vector<8x128xf32>
      %46 = arith.mulf %20, %20 : vector<8x128xf32>
      %47 = arith.mulf %22, %22 : vector<8x128xf32>
      %48 = arith.addf %46, %47 : vector<8x128xf32>
      %49 = arith.mulf %24, %24 : vector<8x128xf32>
      %50 = arith.addf %48, %49 : vector<8x128xf32>
      %51 = arith.mulf %26, %26 : vector<8x128xf32>
      %52 = arith.mulf %28, %28 : vector<8x128xf32>
      %53 = arith.addf %51, %52 : vector<8x128xf32>
      %54 = arith.mulf %30, %30 : vector<8x128xf32>
      %55 = arith.addf %53, %54 : vector<8x128xf32>
      %cst = arith.constant 1.000000e-16 : f32
      %56 = vector.broadcast %cst : f32 to vector<8x128xf32>
      %57 = arith.maximumf %50, %56 : vector<8x128xf32>
      %cst_22 = arith.constant 1.000000e-16 : f32
      %58 = vector.broadcast %cst_22 : f32 to vector<8x128xf32>
      %59 = arith.maximumf %55, %58 : vector<8x128xf32>
      %60 = arith.mulf %57, %59 : vector<8x128xf32>
      %61 = math.rsqrt %60 : vector<8x128xf32>
      %62 = arith.mulf %45, %61 : vector<8x128xf32>
      %cst_23 = arith.constant 1.000000e+00 : f32
      %63 = vector.broadcast %cst_23 : f32 to vector<8x128xf32>
      %64 = arith.subf %63, %62 : vector<8x128xf32>
      %c0_24 = arith.constant 0 : index
      %c0_25 = arith.constant 0 : index
      %c0_26 = arith.constant 0 : index
      %c0_27 = arith.constant 0 : index
      %65 = vector.load %arg4[%c0_24, %c0_25, %c0_26, %c0_27] : memref<1x6x8x128xf32, #tpu.memory_space<vmem>>, vector<1x1x8x128xf32>
      %66 = vector.shape_cast %65 : vector<1x1x8x128xf32> to vector<8x128xf32>
      %67 = vector.shape_cast %31 : vector<8x128xf32> to vector<1x8x128xf32>
      %cst_28 = arith.constant dense<0.000000e+00> : vector<8x128xf32>
      %68 = vector.multi_reduction <add>, %67, %cst_28 [0] : vector<1x8x128xf32> to vector<8x128xf32>
      %69 = arith.addf %66, %68 : vector<8x128xf32>
      %c0_29 = arith.constant 0 : index
      %c0_30 = arith.constant 0 : index
      %c0_31 = arith.constant 0 : index
      %c0_32 = arith.constant 0 : index
      %70 = vector.load %arg4[%c0_29, %c0_30, %c0_31, %c0_32] : memref<1x6x8x128xf32, #tpu.memory_space<vmem>>, vector<1x1x8x128xf32>
      %71 = vector.shape_cast %70 : vector<1x1x8x128xf32> to vector<8x128xf32>
      %72 = vector.shape_cast %69 : vector<8x128xf32> to vector<1x1x8x128xf32>
      tpu.vector_store %arg4[%c0_29, %c0_30, %c0_31, %c0_32], %72 {strides = array<i32>} : memref<1x6x8x128xf32, #tpu.memory_space<vmem>>, vector<1x1x8x128xf32>,
      %c0_33 = arith.constant 0 : index
      %c1_34 = arith.constant 1 : index
      %c0_35 = arith.constant 0 : index
      %c0_36 = arith.constant 0 : index
      %73 = vector.load %arg4[%c0_33, %c1_34, %c0_35, %c0_36] : memref<1x6x8x128xf32, #tpu.memory_space<vmem>>, vector<1x1x8x128xf32>
      %74 = vector.shape_cast %73 : vector<1x1x8x128xf32> to vector<8x128xf32>
      %75 = vector.shape_cast %40 : vector<8x128xf32> to vector<1x8x128xf32>
      %cst_37 = arith.constant dense<0.000000e+00> : vector<8x128xf32>
      %76 = vector.multi_reduction <add>, %75, %cst_37 [0] : vector<1x8x128xf32> to vector<8x128xf32>
      %77 = arith.addf %74, %76 : vector<8x128xf32>
      %c0_38 = arith.constant 0 : index
      %c1_39 = arith.constant 1 : index
      %c0_40 = arith.constant 0 : index
      %c0_41 = arith.constant 0 : index
      %78 = vector.load %arg4[%c0_38, %c1_39, %c0_40, %c0_41] : memref<1x6x8x128xf32, #tpu.memory_space<vmem>>, vector<1x1x8x128xf32>
      %79 = vector.shape_cast %78 : vector<1x1x8x128xf32> to vector<8x128xf32>
      %80 = vector.shape_cast %77 : vector<8x128xf32> to vector<1x1x8x128xf32>
      tpu.vector_store %arg4[%c0_38, %c1_39, %c0_40, %c0_41], %80 {strides = array<i32>} : memref<1x6x8x128xf32, #tpu.memory_space<vmem>>, vector<1x1x8x128xf32>,
      %c0_42 = arith.constant 0 : index
      %c2_43 = arith.constant 2 : index
      %c0_44 = arith.constant 0 : index
      %c0_45 = arith.constant 0 : index
      %81 = vector.load %arg4[%c0_42, %c2_43, %c0_44, %c0_45] : memref<1x6x8x128xf32, #tpu.memory_space<vmem>>, vector<1x1x8x128xf32>
      %82 = vector.shape_cast %81 : vector<1x1x8x128xf32> to vector<8x128xf32>
      %83 = vector.shape_cast %64 : vector<8x128xf32> to vector<1x8x128xf32>
      %cst_46 = arith.constant dense<0.000000e+00> : vector<8x128xf32>
      %84 = vector.multi_reduction <add>, %83, %cst_46 [0] : vector<1x8x128xf32> to vector<8x128xf32>
      %85 = arith.addf %82, %84 : vector<8x128xf32>
      %c0_47 = arith.constant 0 : index
      %c2_48 = arith.constant 2 : index
      %c0_49 = arith.constant 0 : index
      %c0_50 = arith.constant 0 : index
      %86 = vector.load %arg4[%c0_47, %c2_48, %c0_49, %c0_50] : memref<1x6x8x128xf32, #tpu.memory_space<vmem>>, vector<1x1x8x128xf32>
      %87 = vector.shape_cast %86 : vector<1x1x8x128xf32> to vector<8x128xf32>
      %88 = vector.shape_cast %85 : vector<8x128xf32> to vector<1x1x8x128xf32>
      tpu.vector_store %arg4[%c0_47, %c2_48, %c0_49, %c0_50], %88 {strides = array<i32>} : memref<1x6x8x128xf32, #tpu.memory_space<vmem>>, vector<1x1x8x128xf32>,
    } else {
    }
    %c1_i32_4 = arith.constant 1 : i32
    %10 = arith.cmpi slt, %arg1, %c1_i32_4 : i32
    %c1_i32_5 = arith.constant 1 : i32
    %11 = arith.muli %arg0, %c1_i32_5 : i32
    %12 = arith.addi %11, %arg1 : i32
    %c1_i32_6 = arith.constant 1 : i32
    %13 = arith.cmpi slt, %12, %c1_i32_6 : i32
    %14 = arith.andi %10, %13 : i1
    %15 = arith.extui %14 : i1 to i32
    %c0_i32_7 = arith.constant 0 : i32
    %16 = arith.cmpi ne, %15, %c0_i32_7 : i32
    scf.if %16 {
      %c0 = arith.constant 0 : index
      %c0_8 = arith.constant 0 : index
      %c0_9 = arith.constant 0 : index
      %17 = vector.load %arg3[%c0, %c0_8, %c0_9] : memref<5x8x128xf32, #tpu.memory_space<vmem>>, vector<1x8x128xf32>
      %18 = vector.shape_cast %17 : vector<1x8x128xf32> to vector<8x128xf32>
      %c1 = arith.constant 1 : index
      %c0_10 = arith.constant 0 : index
      %c0_11 = arith.constant 0 : index
      %19 = vector.load %arg3[%c1, %c0_10, %c0_11] : memref<5x8x128xf32, #tpu.memory_space<vmem>>, vector<1x8x128xf32>
      %20 = vector.shape_cast %19 : vector<1x8x128xf32> to vector<8x128xf32>
      %c2 = arith.constant 2 : index
      %c0_12 = arith.constant 0 : index
      %c0_13 = arith.constant 0 : index
      %21 = vector.load %arg3[%c2, %c0_12, %c0_13] : memref<5x8x128xf32, #tpu.memory_space<vmem>>, vector<1x8x128xf32>
      %22 = vector.shape_cast %21 : vector<1x8x128xf32> to vector<8x128xf32>
      %c3 = arith.constant 3 : index
      %c0_14 = arith.constant 0 : index
      %c0_15 = arith.constant 0 : index
      %23 = vector.load %arg3[%c3, %c0_14, %c0_15] : memref<5x8x128xf32, #tpu.memory_space<vmem>>, vector<1x8x128xf32>
      %24 = vector.shape_cast %23 : vector<1x8x128xf32> to vector<8x128xf32>
      %c4 = arith.constant 4 : index
      %c0_16 = arith.constant 0 : index
      %c0_17 = arith.constant 0 : index
      %25 = vector.load %arg3[%c4, %c0_16, %c0_17] : memref<5x8x128xf32, #tpu.memory_space<vmem>>, vector<1x8x128xf32>
      %26 = vector.shape_cast %25 : vector<1x8x128xf32> to vector<8x128xf32>
      %27 = math.absf %18 : vector<8x128xf32>
      %cst = arith.constant 1.000000e-01 : f32
      %28 = vector.broadcast %cst : f32 to vector<8x128xf32>
      %29 = arith.minimumf %20, %28 : vector<8x128xf32>
      %30 = arith.subf %27, %29 : vector<8x128xf32>
      %31 = math.absf %30 : vector<8x128xf32>
      %cst_18 = arith.constant 9.99999997E-7 : f32
      %32 = vector.broadcast %cst_18 : f32 to vector<8x128xf32>
      %33 = arith.cmpf ogt, %27, %32 : vector<8x128xf32>
      %cst_19 = arith.constant -1.000000e+02 : f32
      %34 = vector.broadcast %cst_19 : f32 to vector<8x128xf32>
      %35 = arith.mulf %34, %27 : vector<8x128xf32>
      %36 = math.exp %35 : vector<8x128xf32>
      %cst_20 = arith.constant 0.000000e+00 : f32
      %37 = vector.broadcast %cst_20 : f32 to vector<8x128xf32>
      %38 = arith.select %33, %37, %36 : vector<8x128xi1>, vector<8x128xf32>
      %39 = arith.mulf %22, %22 : vector<8x128xf32>
      %40 = arith.mulf %24, %24 : vector<8x128xf32>
      %41 = arith.addf %39, %40 : vector<8x128xf32>
      %42 = arith.mulf %26, %26 : vector<8x128xf32>
      %43 = arith.addf %41, %42 : vector<8x128xf32>
      %44 = math.sqrt %43 : vector<8x128xf32>
      %cst_21 = arith.constant 1.000000e+00 : f32
      %45 = vector.broadcast %cst_21 : f32 to vector<8x128xf32>
      %46 = arith.subf %44, %45 : vector<8x128xf32>
      %47 = arith.mulf %46, %46 : vector<8x128xf32>
      %c0_22 = arith.constant 0 : index
      %c3_23 = arith.constant 3 : index
      %c0_24 = arith.constant 0 : index
      %c0_25 = arith.constant 0 : index
      %48 = vector.load %arg4[%c0_22, %c3_23, %c0_24, %c0_25] : memref<1x6x8x128xf32, #tpu.memory_space<vmem>>, vector<1x1x8x128xf32>
      %49 = vector.shape_cast %48 : vector<1x1x8x128xf32> to vector<8x128xf32>
      %50 = vector.shape_cast %31 : vector<8x128xf32> to vector<1x8x128xf32>
      %cst_26 = arith.constant dense<0.000000e+00> : vector<8x128xf32>
      %51 = vector.multi_reduction <add>, %50, %cst_26 [0] : vector<1x8x128xf32> to vector<8x128xf32>
      %52 = arith.addf %49, %51 : vector<8x128xf32>
      %c0_27 = arith.constant 0 : index
      %c3_28 = arith.constant 3 : index
      %c0_29 = arith.constant 0 : index
      %c0_30 = arith.constant 0 : index
      %53 = vector.load %arg4[%c0_27, %c3_28, %c0_29, %c0_30] : memref<1x6x8x128xf32, #tpu.memory_space<vmem>>, vector<1x1x8x128xf32>
      %54 = vector.shape_cast %53 : vector<1x1x8x128xf32> to vector<8x128xf32>
      %55 = vector.shape_cast %52 : vector<8x128xf32> to vector<1x1x8x128xf32>
      tpu.vector_store %arg4[%c0_27, %c3_28, %c0_29, %c0_30], %55 {strides = array<i32>} : memref<1x6x8x128xf32, #tpu.memory_space<vmem>>, vector<1x1x8x128xf32>,
      %c0_31 = arith.constant 0 : index
      %c4_32 = arith.constant 4 : index
      %c0_33 = arith.constant 0 : index
      %c0_34 = arith.constant 0 : index
      %56 = vector.load %arg4[%c0_31, %c4_32, %c0_33, %c0_34] : memref<1x6x8x128xf32, #tpu.memory_space<vmem>>, vector<1x1x8x128xf32>
      %57 = vector.shape_cast %56 : vector<1x1x8x128xf32> to vector<8x128xf32>
      %58 = vector.shape_cast %38 : vector<8x128xf32> to vector<1x8x128xf32>
      %cst_35 = arith.constant dense<0.000000e+00> : vector<8x128xf32>
      %59 = vector.multi_reduction <add>, %58, %cst_35 [0] : vector<1x8x128xf32> to vector<8x128xf32>
      %60 = arith.addf %57, %59 : vector<8x128xf32>
      %c0_36 = arith.constant 0 : index
      %c4_37 = arith.constant 4 : index
      %c0_38 = arith.constant 0 : index
      %c0_39 = arith.constant 0 : index
      %61 = vector.load %arg4[%c0_36, %c4_37, %c0_38, %c0_39] : memref<1x6x8x128xf32, #tpu.memory_space<vmem>>, vector<1x1x8x128xf32>
      %62 = vector.shape_cast %61 : vector<1x1x8x128xf32> to vector<8x128xf32>
      %63 = vector.shape_cast %60 : vector<8x128xf32> to vector<1x1x8x128xf32>
      tpu.vector_store %arg4[%c0_36, %c4_37, %c0_38, %c0_39], %63 {strides = array<i32>} : memref<1x6x8x128xf32, #tpu.memory_space<vmem>>, vector<1x1x8x128xf32>,
      %c0_40 = arith.constant 0 : index
      %c5 = arith.constant 5 : index
      %c0_41 = arith.constant 0 : index
      %c0_42 = arith.constant 0 : index
      %64 = vector.load %arg4[%c0_40, %c5, %c0_41, %c0_42] : memref<1x6x8x128xf32, #tpu.memory_space<vmem>>, vector<1x1x8x128xf32>
      %65 = vector.shape_cast %64 : vector<1x1x8x128xf32> to vector<8x128xf32>
      %66 = vector.shape_cast %47 : vector<8x128xf32> to vector<1x8x128xf32>
      %cst_43 = arith.constant dense<0.000000e+00> : vector<8x128xf32>
      %67 = vector.multi_reduction <add>, %66, %cst_43 [0] : vector<1x8x128xf32> to vector<8x128xf32>
      %68 = arith.addf %65, %67 : vector<8x128xf32>
      %c0_44 = arith.constant 0 : index
      %c5_45 = arith.constant 5 : index
      %c0_46 = arith.constant 0 : index
      %c0_47 = arith.constant 0 : index
      %69 = vector.load %arg4[%c0_44, %c5_45, %c0_46, %c0_47] : memref<1x6x8x128xf32, #tpu.memory_space<vmem>>, vector<1x1x8x128xf32>
      %70 = vector.shape_cast %69 : vector<1x1x8x128xf32> to vector<8x128xf32>
      %71 = vector.shape_cast %68 : vector<8x128xf32> to vector<1x1x8x128xf32>
      tpu.vector_store %arg4[%c0_44, %c5_45, %c0_46, %c0_47], %71 {strides = array<i32>} : memref<1x6x8x128xf32, #tpu.memory_space<vmem>>, vector<1x1x8x128xf32>,
    } else {
    }
    return
  }
  func.func @transform_0(%arg0: i32, %arg1: i32) -> (i32, i32, i32) {
    %c1_i32 = arith.constant 1 : i32
    %0 = arith.muli %arg0, %c1_i32 : i32
    %1 = arith.addi %0, %arg1 : i32
    %c0_i32 = arith.constant 0 : i32
    %2 = arith.minsi %1, %c0_i32 : i32
    %c0_i32_0 = arith.constant 0 : i32
    %c0_i32_1 = arith.constant 0 : i32
    %c0_i32_2 = arith.constant 0 : i32
    return %c0_i32_0, %2, %c0_i32_1 : i32, i32, i32
  }
  func.func @transform_1(%arg0: i32, %arg1: i32) -> (i32, i32, i32) {
    %c1_i32 = arith.constant 1 : i32
    %0 = arith.muli %arg0, %c1_i32 : i32
    %1 = arith.addi %0, %arg1 : i32
    %c0_i32 = arith.constant 0 : i32
    %2 = arith.minsi %1, %c0_i32 : i32
    %c0_i32_0 = arith.constant 0 : i32
    %c0_i32_1 = arith.constant 0 : i32
    %c0_i32_2 = arith.constant 0 : i32
    return %c0_i32_0, %2, %c0_i32_1 : i32, i32, i32
  }
  func.func @transform_2(%arg0: i32, %arg1: i32) -> (i32, i32, i32, i32) {
    %c0_i32 = arith.constant 0 : i32
    %c0_i32_0 = arith.constant 0 : i32
    %c0_i32_1 = arith.constant 0 : i32
    %c0_i32_2 = arith.constant 0 : i32
    return %arg0, %c0_i32, %c0_i32_0, %c0_i32_1 : i32, i32, i32, i32
  }
}

</mosaic_0001>

<llo_original>
// kernel: tpu_custom_call.1
$region0: #{tpu_custom_call.1}
  #allocation0 [shape = 'u32[]', space=smem, size = 0x4, offset = 0x4, fixed_abs, tag = 'smem constant byte address 0x4 - core index']
  #allocation1 [shape = 'u32[144,128]{1,0:T(1,128)}', space=vmem, size = 0x12000, scoped, tag = 'internal scratch']
  %s0 = inlined_call_operand.hbm [shape: f32[7,8,128], index: 0, kind: input, shape index: {}]
  %s1 = inlined_call_operand.hbm [shape: f32[5,8,128], index: 1, kind: input, shape index: {}]
  %s2 = inlined_call_operand.hbm [shape: f32[2,6,8,128], index: 2, kind: output, shape index: {}]
  %s3 = sld [smem:[#allocation0]]
  $region57: #{tpu_custom_call.1} parent=0
    _
  %s5 = ssub.s32 1, %s3
  %s6 = scalar_select 0, %s5, %s3
  $region1: #{tpu_custom_call.1} parent=0
    #allocation2 [shape = 'u8[57344]{0}', space=vmem, size = 0xe000, scoped, tag = 'input window, operand 0']
    #allocation3 [shape = 's32[2]{0}', space=sflag, size = 0x8, scoped, tag = 'scoped memory for tpu_custom_call.1']
    #allocation4 [shape = 's32[2]{0}', space=sflag, size = 0x8, scoped, tag = 'scoped memory for tpu_custom_call.1']
    #allocation5 [shape = 'u8[40960]{0}', space=vmem, size = 0xa000, scoped, tag = 'input window, operand 1']
    #allocation6 [shape = 's32[2]{0}', space=sflag, size = 0x8, scoped, tag = 'scoped memory for tpu_custom_call.1']
    #allocation7 [shape = 'u8[49152]{0}', space=vmem, size = 0xc000, scoped, tag = 'output window, operand 0']
    %7 = vsyncpa [#allocation3], 0
    %s8 = scalar_lea.sflag [#allocation3], 1
    %9 = vsyncpa %s8, 0
    %10 = vsyncpa [#allocation6], 0
    %s11 = scalar_lea.sflag [#allocation6], 1
    %12 = vsyncpa %s11, 0
    %13 = vsyncpa [#allocation4], 0
    %s14 = scalar_lea.sflag [#allocation4], 1
    %15 = vsyncpa %s14, 0
    loop: start=0, step=1, limit=4
    $region2: #{tpu_custom_call.1} parent=1 // loop_pre_header
      _
    $region3: #{tpu_custom_call.1} parent=1 // loop_header
      %s17 = sphi 0, %s21
      %p18 = scmp.ge.s32.totalorder %s17, 4
      %s24 = sphi 0, %s36
      %s25 = sphi 0, %s32
      %s26 = sphi 0, %s24
      %s27 = sphi 0, %s25
      %s28 = sphi 0, %s26
      %s29 = sphi 0, %s27
      %s45 = sphi 0, %s47
      %s48 = sphi 0, %s45
      %s49 = sphi 0, %s48
      %s65 = sphi 0, %s49
      %s77 = sphi 0, %s79
      %s80 = sphi 0, %s77
      %s81 = sphi 0, %s80
      %s97 = sphi 0, %s81
      %s103 = sphi 0, %s105
      %s106 = sphi 0, %s103
      %s107 = sphi 0, %s106
      %s123 = sphi 0, %s107
    $region4: #{tpu_custom_call.1} parent=1 // loop_header_branch
      %20 = sbr.rel (%p18) target = $region8
    $region5: #{tpu_custom_call.1} parent=1 // loop_body
      %s22 = ssub.s32 %s17, 1
      %s23 = ssub.s32 %s17, 2
      %s30 = sadd.s32 1, %s25
      %p31 = scmp.ge.s32.totalorder %s30, 1
      %s32 = scalar_select %p31, 0, %s30
      %s33 = sadd.s32 1, %s24
      %s34 = scalar_select %p31, %s33, %s24
      %p35 = scmp.ge.s32.totalorder %s34, 2
      %s36 = scalar_select %p35, 0, %s34
      %s37 = sadd.s32 %s24, %s25
      %p38 = scmp.lt.s32.totalorder %s37, 0
      %s39 = scalar_select %p38, %s37, 0
      %s40 = sadd.s32 %s36, %s32
      %p41 = scmp.lt.s32.totalorder %s40, 0
      %s42 = scalar_select %p41, %s40, 0
      %s43 = ssub.s32 %s39, %s42
      %p44 = scmp.eq.s32.totalorder %s43, 0
      %s46 = sadd.s32 %s45, 1
      %s47 = scalar_select %p44, %s45, %s46
      %p50 = pneg %p44
      %p51 = scmp.eq.s32.totalorder %s17, 1
      %p52 = por %p50, %p51
      %p53 = scmp.ne.s32.totalorder %s45, %s48
      %p54 = scmp.eq.s32.totalorder %s17, 0
      %p55 = por %p53, %p54
      %p56 = scmp.ne.s32.totalorder %s45, %s48
      %p57 = scmp.eq.s32.totalorder %s22, 1
      %p58 = por %p56, %p57
      %p59 = scmp.ne.s32.totalorder %s48, %s49
      %p60 = scmp.eq.s32.totalorder %s22, 0
      %p61 = por %p59, %p60
      %p62 = scmp.ne.s32.totalorder %s48, %s49
      %p63 = scmp.eq.s32.totalorder %s23, 1
      %p64 = por %p62, %p63
      %p66 = scmp.ne.s32.totalorder %s49, %s65
      %p67 = scmp.eq.s32.totalorder %s23, 0
      %p68 = por %p66, %p67
      %s69 = sadd.s32 %s24, %s25
      %p70 = scmp.lt.s32.totalorder %s69, 0
      %s71 = scalar_select %p70, %s69, 0
      %s72 = sadd.s32 %s36, %s32
      %p73 = scmp.lt.s32.totalorder %s72, 0
      %s74 = scalar_select %p73, %s72, 0
      %s75 = ssub.s32 %s71, %s74
      %p76 = scmp.eq.s32.totalorder %s75, 0
      %s78 = sadd.s32 %s77, 1
      %s79 = scalar_select %p76, %s77, %s78
      %p82 = pneg %p76
      %p83 = scmp.eq.s32.totalorder %s17, 1
      %p84 = por %p82, %p83
      %p85 = scmp.ne.s32.totalorder %s77, %s80
      %p86 = scmp.eq.s32.totalorder %s17, 0
      %p87 = por %p85, %p86
      %p88 = scmp.ne.s32.totalorder %s77, %s80
      %p89 = scmp.eq.s32.totalorder %s22, 1
      %p90 = por %p88, %p89
      %p91 = scmp.ne.s32.totalorder %s80, %s81
      %p92 = scmp.eq.s32.totalorder %s22, 0
      %p93 = por %p91, %p92
      %p94 = scmp.ne.s32.totalorder %s80, %s81
      %p95 = scmp.eq.s32.totalorder %s23, 1
      %p96 = por %p94, %p95
      %p98 = scmp.ne.s32.totalorder %s81, %s97
      %p99 = scmp.eq.s32.totalorder %s23, 0
      %p100 = por %p98, %p99
      %s101 = ssub.s32 %s24, %s36
      %p102 = scmp.eq.s32.totalorder %s101, 0
      %s104 = sadd.s32 %s103, 1
      %s105 = scalar_select %p102, %s103, %s104
      %p108 = pneg %p102
      %p109 = scmp.eq.s32.totalorder %s17, 1
      %p110 = por %p108, %p109
      %p111 = scmp.ne.s32.totalorder %s103, %s106
      %p112 = scmp.eq.s32.totalorder %s17, 0
      %p113 = por %p111, %p112
      %p114 = scmp.ne.s32.totalorder %s103, %s106
      %p115 = scmp.eq.s32.totalorder %s22, 1
      %p116 = por %p114, %p115
      %p117 = scmp.ne.s32.totalorder %s106, %s107
      %p118 = scmp.eq.s32.totalorder %s22, 0
      %p119 = por %p117, %p118
      %p120 = scmp.ne.s32.totalorder %s106, %s107
      %p121 = scmp.eq.s32.totalorder %s23, 1
      %p122 = por %p120, %p121
      %p124 = scmp.ne.s32.totalorder %s107, %s123
      %p125 = scmp.eq.s32.totalorder %s23, 0
      %p126 = por %p124, %p125
      %p127 = scmp.le.s32.totalorder 1, %s17
      %p128 = scmp.lt.s32.totalorder %s17, 3
      %p129 = pnand %p127, %p128
      %p130 = pneg %p129
      // Predicated region
      $region9: #{tpu_custom_call.1} parent=5 // pred_check
        _
      $region10: #{tpu_custom_call.1} parent=5 // pred_check_branch
        %132 = sbr.rel (%p129) target = $region12
      $region11: #{tpu_custom_call.1} parent=5 // pred_region
        %s133 = ssub.s32 %s17, 1
      $region12: #{tpu_custom_call.1} parent=5 // pred_fallthru
        _
      %p134 = scmp.lt.s32.totalorder %s17, 2
      // Predicated region
      $region13: #{tpu_custom_call.1} parent=5 // pred_check
        %p135 = pneg %p134
      $region14: #{tpu_custom_call.1} parent=5 // pred_check_branch
        %137 = sbr.rel (%p135) target = $region16
      $region15: #{tpu_custom_call.1} parent=5 // pred_region
        // Predicated region
        $region17: #{tpu_custom_call.1} parent=15 // pred_check
          %p138 = pneg %p55
        $region18: #{tpu_custom_call.1} parent=15 // pred_check_branch
          %140 = sbr.rel (%p138) target = $region20
        $region19: #{tpu_custom_call.1} parent=15 // pred_region
          %s141 = sand.u32 %s45, 1
          %s142 = scalar_lea.sflag [#allocation3], %s141
          %s143 = sand.u32 %s45, 1
          %s144 = smul.addr %s143, 56
          %s145 = scalar_lea.vmem [#allocation2], %s144
          %s146 = sadd.s32 %s24, %s25
          %p147 = scmp.lt.s32.totalorder %s146, 0
          %s148 = scalar_select %p147, %s146, 0
          %s150 = ssub.s32 896, 896
          %151 = vsyncadd %s142, %s150
          %s152 = smul.addr %s148, 128
          %s153 = scalar_lea.hbm %s0, %s152
          %s154 = sshll.u32 %s145, 4
          %s155 = int_to_ptr.vmem [resolvable:$true] %s154
          %160 = dma.hbm_to_vmem [thread:$0]  %s153, 896, %s155, %s142, 128, 128, 8
        $region20: #{tpu_custom_call.1} parent=15 // pred_fallthru
          _
        // Predicated region
        $region21: #{tpu_custom_call.1} parent=15 // pred_check
          %p161 = pneg %p87
        $region22: #{tpu_custom_call.1} parent=15 // pred_check_branch
          %163 = sbr.rel (%p161) target = $region24
        $region23: #{tpu_custom_call.1} parent=15 // pred_region
          %s164 = sand.u32 %s77, 1
          %s165 = scalar_lea.sflag [#allocation6], %s164
          %s166 = sand.u32 %s77, 1
          %s167 = smul.addr %s166, 40
          %s168 = scalar_lea.vmem [#allocation5], %s167
          %s169 = sadd.s32 %s24, %s25
          %p170 = scmp.lt.s32.totalorder %s169, 0
          %s171 = scalar_select %p170, %s169, 0
          %s173 = ssub.s32 640, 640
          %174 = vsyncadd %s165, %s173
          %s175 = smul.addr %s171, 128
          %s176 = scalar_lea.hbm %s1, %s175
          %s177 = sshll.u32 %s168, 4
          %s178 = int_to_ptr.vmem [resolvable:$true] %s177
          %183 = dma.hbm_to_vmem [thread:$0]  %s176, 640, %s178, %s165, 128, 128, 8
        $region24: #{tpu_custom_call.1} parent=15 // pred_fallthru
          _
      $region16: #{tpu_custom_call.1} parent=5 // pred_fallthru
        _
      %p184 = scmp.le.s32.totalorder 1, %s17
      %p185 = scmp.lt.s32.totalorder %s17, 3
      %p186 = pnand %p184, %p185
      %p187 = pneg %p186
      // Predicated region
      $region25: #{tpu_custom_call.1} parent=5 // pred_check
        _
      $region26: #{tpu_custom_call.1} parent=5 // pred_check_branch
        %189 = sbr.rel (%p186) target = $region28
      $region27: #{tpu_custom_call.1} parent=5 // pred_region
        %s190 = ssub.s32 %s17, 1
        %s191 = sand.u32 %s48, 1
        %s192 = scalar_lea.sflag [#allocation3], %s191
        %s193 = sand.u32 %s48, 1
        %s194 = smul.addr %s193, 56
        %s195 = scalar_lea.vmem [#allocation2], %s194
        // Predicated region
        $region29: #{tpu_custom_call.1} parent=27 // pred_check
          %p196 = pneg %p61
        $region30: #{tpu_custom_call.1} parent=27 // pred_check_branch
          %198 = sbr.rel (%p196) target = $region32
        $region31: #{tpu_custom_call.1} parent=27 // pred_region
          %199 = dma.done %s192, 896
        $region32: #{tpu_custom_call.1} parent=27 // pred_fallthru
          _
        %s200 = sand.u32 %s80, 1
        %s201 = scalar_lea.sflag [#allocation6], %s200
        %s202 = sand.u32 %s80, 1
        %s203 = smul.addr %s202, 40
        %s204 = scalar_lea.vmem [#allocation5], %s203
        // Predicated region
        $region33: #{tpu_custom_call.1} parent=27 // pred_check
          %p205 = pneg %p93
        $region34: #{tpu_custom_call.1} parent=27 // pred_check_branch
          %207 = sbr.rel (%p205) target = $region36
        $region35: #{tpu_custom_call.1} parent=27 // pred_region
          %208 = dma.done %s201, 640
        $region36: #{tpu_custom_call.1} parent=27 // pred_fallthru
          _
        %s209 = sand.u32 %s48, 1
        %s210 = scalar_lea.sflag [#allocation3], %s209
        %s211 = sand.u32 %s48, 1
        %s212 = smul.addr %s211, 56
        %s213 = scalar_lea.vmem [#allocation2], %s212
        %p214 = pneg %p61
        %p215 = pneg %p58
        %s216 = sand.u32 %s80, 1
        %s217 = scalar_lea.sflag [#allocation6], %s216
        %s218 = sand.u32 %s80, 1
        %s219 = smul.addr %s218, 40
        %s220 = scalar_lea.vmem [#allocation5], %s219
        %p221 = pneg %p93
        %p222 = pneg %p90
        %p223 = pneg %p119
        %p224 = pneg %p116
        %s225 = sand.u32 %s106, 1
        %s226 = scalar_lea.sflag [#allocation4], %s225
        %s227 = sand.u32 %s106, 1
        %s228 = smul.addr %s227, 48
        %s229 = scalar_lea.vmem [#allocation7], %s228
        %s230 = sadd.s32 %s26, %s27
        %p231 = scmp.lt.s32.totalorder %s230, 0
        %s232 = scalar_select %p231, %s230, 0
        %s233 = sadd.s32 %s26, %s27
        %p234 = scmp.lt.s32.totalorder %s233, 0
        %s235 = scalar_select %p234, %s233, 0
        %p236 = scmp.eq.s32.totalorder %s27, 0
        // Predicated region
        $region37: #{tpu_custom_call.1} parent=27 // pred_check
          %p237 = pneg %p236
        $region38: #{tpu_custom_call.1} parent=27 // pred_check_branch
          %239 = sbr.rel (%p237) target = $region40
        $region39: #{tpu_custom_call.1} parent=27 // pred_region
          %240 = vst [vmem:[%s229] sm:$0xff] 0.0
          %241 = vst [vmem:[%s229 + $0x8] sm:$0xff] 0.0
          %242 = vst [vmem:[%s229 + $0x10] sm:$0xff] 0.0
          %243 = vst [vmem:[%s229 + $0x18] sm:$0xff] 0.0
          %244 = vst [vmem:[%s229 + $0x20] sm:$0xff] 0.0
          %245 = vst [vmem:[%s229 + $0x28] sm:$0xff] 0.0
        $region40: #{tpu_custom_call.1} parent=27 // pred_fallthru
          _
        %p246 = scmp.lt.s32.totalorder %s27, 1
        %s247 = sadd.s32 %s26, %s27
        %p248 = scmp.lt.s32.totalorder %s247, 1
        %p249 = pnand %p246, %p248
        %p250 = pneg %p249
        // Predicated region
        $region41: #{tpu_custom_call.1} parent=27 // pred_check
          _
        $region42: #{tpu_custom_call.1} parent=27 // pred_check_branch
          %252 = sbr.rel (%p249) target = $region44
        $region43: #{tpu_custom_call.1} parent=27 // pred_region
          %v253 = vld [vmem:[%s195] sm:$0xff]
          %s254 = scalar_lea.vmem %s195, 8 [#allocation2]
          %v255 = vld [vmem:[%s254] sm:$0xff]
          %s256 = scalar_lea.vmem %s195, 16 [#allocation2]
          %v257 = vld [vmem:[%s256] sm:$0xff]
          %s258 = scalar_lea.vmem %s195, 24 [#allocation2]
          %v259 = vld [vmem:[%s258] sm:$0xff]
          %s260 = scalar_lea.vmem %s195, 32 [#allocation2]
          %v261 = vld [vmem:[%s260] sm:$0xff]
          %s262 = scalar_lea.vmem %s195, 40 [#allocation2]
          %v263 = vld [vmem:[%s262] sm:$0xff]
          %s264 = scalar_lea.vmem %s195, 48 [#allocation2]
          %v265 = vld [vmem:[%s264] sm:$0xff]
          %v266 = vand.u32 2147483647, %v253
          %v267 = vsub.f32 %v255, %v261
          %v268 = vsub.f32 %v257, %v263
          %v269 = vsub.f32 %v259, %v265
          %v270 = vmul.f32 %v267, %v267
          %v271 = vmul.f32 %v268, %v268
          %v272 = vadd.f32 %v270, %v271
          %v273 = vmul.f32 %v269, %v269
          %v274 = vadd.f32 %v272, %v273
          %v275 = vrsqrt.pop %v274
          %v276 = vmul.f32 %v274, %v275
          %vm277 = vcmp.eq.f32.partialorder %v274, inf
          %v278 = vsel %vm277, %v274, %v276
          %vm279 = vcmp.eq.f32.partialorder %v274, 0.0
          %v280 = vand.u32 %v274, 2147483648
          %v281 = vsel %vm279, %v280, %v278
          %v282 = vmul.f32 %v255, %v261
          %v283 = vmul.f32 %v257, %v263
          %v284 = vadd.f32 %v282, %v283
          %v285 = vmul.f32 %v259, %v265
          %v286 = vadd.f32 %v284, %v285
          %v287 = vmul.f32 %v255, %v255
          %v288 = vmul.f32 %v257, %v257
          %v289 = vadd.f32 %v287, %v288
          %v290 = vmul.f32 %v259, %v259
          %v291 = vadd.f32 %v289, %v290
          %v292 = vmul.f32 %v261, %v261
          %v293 = vmul.f32 %v263, %v263
          %v294 = vadd.f32 %v292, %v293
          %v295 = vmul.f32 %v265, %v265
          %v296 = vadd.f32 %v294, %v295
          %v297 = vmax.f32 %v291, 1e-16
          %v298 = vmax.f32 %v296, 1e-16
          %v299 = vmul.f32 %v297, %v298
          %v300 = vrsqrt.pop %v299
          %v301 = vmul.f32 %v286, %v300
          %v302 = vsub.f32 1.0, %v301
          %v303 = vld [vmem:[%s229] sm:$0xff]
          %v304 = vadd.f32 %v266, 0.0
          %v305 = vadd.f32 %v303, %v304
          %306 = vst [vmem:[%s229] sm:$0xff] %v305
          %s307 = scalar_lea.vmem %s229, 8 [#allocation7]
          %v308 = vld [vmem:[%s307] sm:$0xff]
          %v309 = vadd.f32 %v281, 0.0
          %v310 = vadd.f32 %v308, %v309
          %311 = vst [vmem:[%s307] sm:$0xff] %v310
          %s312 = scalar_lea.vmem %s229, 16 [#allocation7]
          %v313 = vld [vmem:[%s312] sm:$0xff]
          %v314 = vadd.f32 %v302, 0.0
          %v315 = vadd.f32 %v313, %v314
          %316 = vst [vmem:[%s312] sm:$0xff] %v315
          %v317 = vld [vmem:[%s204] sm:$0xff]
          %s318 = scalar_lea.vmem %s204, 8 [#allocation5]
          %v319 = vld [vmem:[%s318] sm:$0xff]
          %s320 = scalar_lea.vmem %s204, 16 [#allocation5]
          %v321 = vld [vmem:[%s320] sm:$0xff]
          %s322 = scalar_lea.vmem %s204, 24 [#allocation5]
          %v323 = vld [vmem:[%s322] sm:$0xff]
          %s324 = scalar_lea.vmem %s204, 32 [#allocation5]
          %v325 = vld [vmem:[%s324] sm:$0xff]
          %v326 = vand.u32 2147483647, %v317
          %v327 = vmin.f32 %v319, 0.1
          %v328 = vsub.f32 %v326, %v327
          %v329 = vand.u32 2147483647, %v328
          %vm330 = vcmp.gt.f32.partialorder %v326, 1e-06
          %v331 = vmul.f32 %v326, -100.0
          %v332 = vmul.f32 %v331, 1.442695
          %v333 = vpow.pop %v332
          %v334 = vsel %vm330, 0.0, %v333
          %v335 = vmul.f32 %v321, %v321
          %v336 = vmul.f32 %v323, %v323
          %v337 = vadd.f32 %v335, %v336
          %v338 = vmul.f32 %v325, %v325
          %v339 = vadd.f32 %v337, %v338
          %v340 = vrsqrt.pop %v339
          %v341 = vmul.f32 %v339, %v340
          %vm342 = vcmp.eq.f32.partialorder %v339, inf
          %v343 = vsel %vm342, %v339, %v341
          %vm344 = vcmp.eq.f32.partialorder %v339, 0.0
          %v345 = vand.u32 %v339, 2147483648
          %v346 = vsel %vm344, %v345, %v343
          %v347 = vsub.f32 %v346, 1.0
          %v348 = vmul.f32 %v347, %v347
          %s349 = scalar_lea.vmem %s229, 24 [#allocation7]
          %v350 = vld [vmem:[%s349] sm:$0xff]
          %v351 = vadd.f32 %v329, 0.0
          %v352 = vadd.f32 %v350, %v351
          %353 = vst [vmem:[%s349] sm:$0xff] %v352
          %s354 = scalar_lea.vmem %s229, 32 [#allocation7]
          %v355 = vld [vmem:[%s354] sm:$0xff]
          %v356 = vadd.f32 %v334, 0.0
          %v357 = vadd.f32 %v355, %v356
          %358 = vst [vmem:[%s354] sm:$0xff] %v357
          %s359 = scalar_lea.vmem %s229, 40 [#allocation7]
          %v360 = vld [vmem:[%s359] sm:$0xff]
          %v361 = vadd.f32 %v348, 0.0
          %v362 = vadd.f32 %v360, %v361
          %363 = vst [vmem:[%s359] sm:$0xff] %v362
        $region44: #{tpu_custom_call.1} parent=27 // pred_fallthru
          _
        %s364 = sand.u32 %s106, 1
        %s365 = scalar_lea.sflag [#allocation4], %s364
        %s366 = sand.u32 %s106, 1
        %s367 = smul.addr %s366, 48
        %s368 = scalar_lea.vmem [#allocation7], %s367
        // Predicated region
        $region45: #{tpu_custom_call.1} parent=27 // pred_check
          %p369 = pneg %p116
        $region46: #{tpu_custom_call.1} parent=27 // pred_check_branch
          %371 = sbr.rel (%p369) target = $region48
        $region47: #{tpu_custom_call.1} parent=27 // pred_region
          %s373 = ssub.s32 768, 768
          %374 = vsyncadd %s365, %s373
          %s375 = smul.addr %s26, 6
          %s376 = smul.addr %s375, 128
          %s377 = scalar_lea.hbm %s2, %s376
          %s378 = sshll.u32 %s368, 4
          %s379 = int_to_ptr.vmem [resolvable:$true] %s378
          %384 = dma.vmem_to_hbm [thread:$0]  %s379, 768, %s377, %s365, 128, 128, 8
        $region48: #{tpu_custom_call.1} parent=27 // pred_fallthru
          _
      $region28: #{tpu_custom_call.1} parent=5 // pred_fallthru
        _
      %p385 = scmp.le.s32.totalorder 2, %s17
      // Predicated region
      $region49: #{tpu_custom_call.1} parent=5 // pred_check
        %p386 = pneg %p385
      $region50: #{tpu_custom_call.1} parent=5 // pred_check_branch
        %388 = sbr.rel (%p386) target = $region52
      $region51: #{tpu_custom_call.1} parent=5 // pred_region
        %s389 = ssub.s32 %s17, 2
        // Predicated region
        $region53: #{tpu_custom_call.1} parent=51 // pred_check
          %p390 = pneg %p122
        $region54: #{tpu_custom_call.1} parent=51 // pred_check_branch
          %392 = sbr.rel (%p390) target = $region56
        $region55: #{tpu_custom_call.1} parent=51 // pred_region
          %s393 = sand.u32 %s107, 1
          %s394 = scalar_lea.sflag [#allocation4], %s393
          %s395 = sand.u32 %s107, 1
          %s396 = smul.addr %s395, 48
          %s397 = scalar_lea.vmem [#allocation7], %s396
          %398 = dma.done %s394, 768
        $region56: #{tpu_custom_call.1} parent=51 // pred_fallthru
          _
      $region52: #{tpu_custom_call.1} parent=5 // pred_fallthru
        _
    $region6: #{tpu_custom_call.1} parent=1 // loop_footer
      %s21 = sadd.s32 1, %s17
    $region7: #{tpu_custom_call.1} parent=1 // loop_footer_branch
      %16 = sbr.rel target = $region3
    $region8: #{tpu_custom_call.1} parent=1 // loop_exit
      _
    %399 = vsyncpa [#allocation3], 1
    %s400 = scalar_lea.sflag [#allocation3], 1
    %401 = vsyncpa %s400, 1
    %402 = vsyncpa [#allocation6], 1
    %s403 = scalar_lea.sflag [#allocation6], 1
    %404 = vsyncpa %s403, 1
    %405 = vsyncpa [#allocation4], 1
    %s406 = scalar_lea.sflag [#allocation4], 1
    %407 = vsyncpa %s406, 1

</llo_original>
